<compile_context>
chip_gen: v7x
topology: tpu7x:2x2x1
jax: 0.10.0
libtpu: 0.0.40
codegen_flags: <defaults>
</compile_context>

<pallas_src>
import functools

import jax
import jax.numpy as jnp
from jax.experimental import pallas as pl
from jax.experimental.pallas import tpu as pltpu

_VMEM_LIMIT = 32 * 1024 * 1024  # well under v7x's 64 MiB/TC; ample for these tiles


def _round_up(x, m):
    return ((x + m - 1) // m) * m


def _pick_tile(dim, cap, aligns):
    """Largest tile <= cap dividing `dim`, multiple of one of `aligns` (in order);
    falls back to the full dimension (always a legal block)."""
    if dim <= cap:
        return dim
    for align in aligns:
        t = (cap // align) * align
        while t >= align:
            if dim % t == 0:
                return t
            t -= align
    return dim


def _sublane(dtype):
    return 16 if dtype == jnp.bfloat16 else 8


# ---------------------------------------------------------------------------
# Tiled matmul + bias kernel:  o = x @ w + b
# ---------------------------------------------------------------------------
def _matmul_bias_kernel(x_ref, w_ref, b_ref, o_ref, acc_ref):
    @pl.when(pl.program_id(2) == 0)
    def _init():
        acc_ref[...] = jnp.zeros_like(acc_ref)

    acc_ref[...] += jnp.dot(x_ref[...], w_ref[...],
                            preferred_element_type=jnp.float32)

    @pl.when(pl.program_id(2) == pl.num_programs(2) - 1)
    def _finalize():
        o_ref[...] = (acc_ref[...] + b_ref[...].astype(jnp.float32)).astype(o_ref.dtype)


def pallas_linear(x2d, w, b, *, out_dtype, tm_cap=256, tn_cap=256, tk_cap=512):
    """x2d: (M, K), w: (K, N), b: (1, N) -> (M, N) = x2d @ w + b."""
    M, K = x2d.shape
    N = w.shape[1]
    sub = _sublane(x2d.dtype)
    tm = _pick_tile(M, tm_cap, (128, sub))
    tn = _pick_tile(N, tn_cap, (128,))
    tk = _pick_tile(K, tk_cap, (128,))
    grid = (M // tm, N // tn, K // tk)
    return pl.pallas_call(
        _matmul_bias_kernel,
        out_shape=jax.ShapeDtypeStruct((M, N), out_dtype),
        grid_spec=pltpu.PrefetchScalarGridSpec(
            num_scalar_prefetch=0,
            grid=grid,
            in_specs=[
                pl.BlockSpec((tm, tk), lambda i, j, k: (i, k)),
                pl.BlockSpec((tk, tn), lambda i, j, k: (k, j)),
                pl.BlockSpec((1, tn), lambda i, j, k: (0, j)),
            ],
            out_specs=pl.BlockSpec((tm, tn), lambda i, j, k: (i, j)),
            scratch_shapes=[pltpu.VMEM((tm, tn), jnp.float32)],
        ),
        compiler_params=pltpu.CompilerParams(
            dimension_semantics=("parallel", "parallel", "arbitrary"),
            vmem_limit_bytes=_VMEM_LIMIT,
        ),
    )(x2d, w, b)


# ---------------------------------------------------------------------------
# Attention kernels
# ---------------------------------------------------------------------------
def _attention_single_kv_kernel(kvlen_ref, q_ref, k_ref, v_ref, o_ref, *, mask_kv):
    """One KV step per (head, q-tile): K/V stay VMEM-resident across q tiles,
    plain (non-online) softmax -> no per-step rescale work."""
    q = q_ref[0]   # (tq,  Dh) -- scale already folded into wq/bq
    k = k_ref[0]   # (S_pad, Dh)
    v = v_ref[0]   # (S_pad, Dh)

    # s = q @ k^T : contract last dims directly, no materialized transpose.
    s = jax.lax.dot_general(q, k, dimension_numbers=(((1,), (1,)), ((), ())),
                            preferred_element_type=jnp.float32)        # (tq, S_pad)
    if mask_kv:  # only emitted when the sequence was padded
        kpos = jax.lax.broadcasted_iota(jnp.int32, s.shape, 1)
        s = jnp.where(kpos < kvlen_ref[0], s, -1e30)

    m = jnp.max(s, axis=-1, keepdims=True)
    p = jnp.exp(s - m)
    l = jnp.sum(p, axis=-1, keepdims=True)
    pv = jax.lax.dot_general(p.astype(v.dtype), v,
                             dimension_numbers=(((1,), (0,)), ((), ())),
                             preferred_element_type=jnp.float32)       # (tq, Dh)
    o_ref[0] = (pv * pl.reciprocal(l, approx=True)).astype(o_ref.dtype)


def _attention_multi_kv_kernel(kvlen_ref, q_ref, k_ref, v_ref, o_ref,
                               m_ref, l_ref, acc_ref, *, mask_kv):
    """Fallback for very long sequences: KV-tiled online softmax."""
    ki = pl.program_id(2)

    @pl.when(ki == 0)
    def _init():
        m_ref[...] = jnp.full_like(m_ref, -jnp.inf)
        l_ref[...] = jnp.zeros_like(l_ref)
        acc_ref[...] = jnp.zeros_like(acc_ref)

    q = q_ref[0]
    k = k_ref[0]
    v = v_ref[0]
    s = jax.lax.dot_general(q, k, dimension_numbers=(((1,), (1,)), ((), ())),
                            preferred_element_type=jnp.float32)        # (tq, tkv)
    if mask_kv:
        kpos = ki * s.shape[1] + jax.lax.broadcasted_iota(jnp.int32, s.shape, 1)
        s = jnp.where(kpos < kvlen_ref[0], s, -1e30)                   # finite: NaN-safe

    m_prev = m_ref[...]
    m_new = jnp.maximum(m_prev, jnp.max(s, axis=-1, keepdims=True))
    alpha = jnp.exp(m_prev - m_new)
    p = jnp.exp(s - m_new)
    l_ref[...] = alpha * l_ref[...] + jnp.sum(p, axis=-1, keepdims=True)
    acc_ref[...] = alpha * acc_ref[...] + jax.lax.dot_general(
        p.astype(v.dtype), v, dimension_numbers=(((1,), (0,)), ((), ())),
        preferred_element_type=jnp.float32)
    m_ref[...] = m_new

    @pl.when(ki == pl.num_programs(2) - 1)
    def _finalize():
        o_ref[0] = (acc_ref[...] *
                    pl.reciprocal(l_ref[...], approx=True)).astype(o_ref.dtype)


def pallas_flash_attention(q, k, v, kv_len, *, out_dtype, tq_cap=256, tkv_cap=512):
    """q, k, v: (B*H, T_pad, Dh). kv_len = true (unpadded) key length (python int)."""
    BH, T_pad, Dh = q.shape
    S_pad = k.shape[1]
    sub = _sublane(q.dtype)
    tq = _pick_tile(T_pad, tq_cap, (128, sub))
    mask_kv = (S_pad != kv_len)
    kv_len_arr = jnp.asarray([kv_len], dtype=jnp.int32)  # SMEM scalar prefetch

    dsize = jnp.dtype(q.dtype).itemsize
    # double-buffered K+V blocks + f32 score tile: keep K/V resident if comfortably small
    resident_bytes = 2 * 2 * S_pad * Dh * dsize + tq * S_pad * 4

    if resident_bytes <= 8 * 1024 * 1024:
        kernel = functools.partial(_attention_single_kv_kernel, mask_kv=mask_kv)
        return pl.pallas_call(
            kernel,
            out_shape=jax.ShapeDtypeStruct((BH, T_pad, Dh), out_dtype),
            grid_spec=pltpu.PrefetchScalarGridSpec(
                num_scalar_prefetch=1,
                grid=(BH, T_pad // tq),
                in_specs=[
                    pl.BlockSpec((1, tq, Dh), lambda b, qi, kvlen: (b, qi, 0)),
                    # K/V block index is constant across qi -> stays VMEM-resident.
                    pl.BlockSpec((1, S_pad, Dh), lambda b, qi, kvlen: (b, 0, 0)),
                    pl.BlockSpec((1, S_pad, Dh), lambda b, qi, kvlen: (b, 0, 0)),
                ],
                out_specs=pl.BlockSpec((1, tq, Dh), lambda b, qi, kvlen: (b, qi, 0)),
            ),
            compiler_params=pltpu.CompilerParams(
                dimension_semantics=("parallel", "parallel"),
                vmem_limit_bytes=_VMEM_LIMIT,
            ),
        )(kv_len_arr, q, k, v)

    # Long-sequence fallback: online-softmax over KV tiles.
    tkv = _pick_tile(S_pad, tkv_cap, (128, sub))
    kernel = functools.partial(_attention_multi_kv_kernel, mask_kv=mask_kv)
    return pl.pallas_call(
        kernel,
        out_shape=jax.ShapeDtypeStruct((BH, T_pad, Dh), out_dtype),
        grid_spec=pltpu.PrefetchScalarGridSpec(
            num_scalar_prefetch=1,
            grid=(BH, T_pad // tq, S_pad // tkv),
            in_specs=[
                pl.BlockSpec((1, tq, Dh), lambda b, qi, ki, kvlen: (b, qi, 0)),
                pl.BlockSpec((1, tkv, Dh), lambda b, qi, ki, kvlen: (b, ki, 0)),
                pl.BlockSpec((1, tkv, Dh), lambda b, qi, ki, kvlen: (b, ki, 0)),
            ],
            out_specs=pl.BlockSpec((1, tq, Dh), lambda b, qi, ki, kvlen: (b, qi, 0)),
            scratch_shapes=[
                pltpu.VMEM((tq, 1), jnp.float32),    # running row max m
                pltpu.VMEM((tq, 1), jnp.float32),    # running denominator l
                pltpu.VMEM((tq, Dh), jnp.float32),   # running numerator acc
            ],
        ),
        compiler_params=pltpu.CompilerParams(
            dimension_semantics=("parallel", "parallel", "arbitrary"),
            vmem_limit_bytes=_VMEM_LIMIT,
        ),
    )(kv_len_arr, q, k, v)


# ---------------------------------------------------------------------------
# One-time parameter packing (hoisted out of the forward)
# ---------------------------------------------------------------------------
def pack_whisper_attention_params(params, num_heads, *, compute_dtype=jnp.bfloat16):
    """Pre-pack weights: fuse QKV, transpose to (in, out), fold softmax scale into
    wq/bq, cast MXU operands to compute_dtype (biases stay f32)."""
    E = params["wq"].shape[0]
    Dh = E // num_heads
    scale = Dh ** (-0.5)
    wqkv = jnp.concatenate(
        [(params["wq"] * scale).T, params["wk"].T, params["wv"].T], axis=1
    ).astype(compute_dtype)                                            # (E, 3E)
    bqkv = jnp.concatenate(
        [params["bq"] * scale, jnp.zeros((E,), jnp.float32), params["bv"]]
    ).reshape(1, 3 * E).astype(jnp.float32)                            # (1, 3E); k_proj: bias=False
    return {
        "wqkv": wqkv,
        "bqkv": bqkv,
        "wo": params["wo"].T.astype(compute_dtype),                    # (E, E)
        "bo": params["bo"].reshape(1, E).astype(jnp.float32),          # (1, E)
    }


# ---------------------------------------------------------------------------
# WhisperFlashAttention2 forward (self-attention path)
# ---------------------------------------------------------------------------
def whisper_flash_attention2_forward(hidden_states, packed, num_heads,
                                     *, compute_dtype=jnp.bfloat16):
    """Self-attention path of WhisperFlashAttention2.forward
    (no KV cache, no attention mask, non-causal, dropout=0 / eval mode)."""
    B, T, E = hidden_states.shape
    H = num_heads
    Dh = E // H
    out_dtype = hidden_states.dtype

    # Pad the sequence once up-front so every downstream kernel tiles cleanly
    # (padded keys are masked in-kernel; padded query rows are sliced off at the end).
    sub = _sublane(compute_dtype)
    seq_mult = 128 if T >= 128 else sub
    T_pad = _round_up(T, seq_mult)
    x = hidden_states
    if T_pad != T:
        x = jnp.pad(x, ((0, 0), (0, T_pad - T), (0, 0)))
    x2d = x.reshape(B * T_pad, E).astype(compute_dtype)

    # Fused QKV projection (softmax scale already folded into wq/bq).
    qkv = pallas_linear(x2d, packed["wqkv"], packed["bqkv"],
                        out_dtype=compute_dtype)                        # (B*T_pad, 3E)

    # Head split: a single transpose pass for q, k and v together.
    # TODO(synk): a head-indexing BlockSpec reading (tq, Dh) slabs straight out of the
    # (B*T_pad, 3E) qkv buffer would remove this pass, but needs lane-unaligned Dh
    # column blocks; kept as one fused XLA transpose for layout safety.
    qkv = qkv.reshape(B, T_pad, 3, H, Dh).transpose(2, 0, 3, 1, 4)
    qkv = qkv.reshape(3, B * H, T_pad, Dh)
    qh, kh, vh = qkv[0], qkv[1], qkv[2]

    attn = pallas_flash_attention(qh, kh, vh, T, out_dtype=compute_dtype)  # (B*H,T_pad,Dh)

    # Head merge back to (B*T_pad, E): one transpose pass.
    # TODO(synk): could be folded into the out-projection by adding H as a reduction
    # grid axis (W_o viewed as (H, Dh, E)); K-per-step=Dh underfills the MXU though.
    attn = attn.reshape(B, H, T_pad, Dh).transpose(0, 2, 1, 3).reshape(B * T_pad, E)

    out = pallas_linear(attn, packed["wo"], packed["bo"], out_dtype=out_dtype)
    return out.reshape(B, T_pad, E)[:, :T, :]
    # TODO(synk): cross-attention / EncoderDecoderCache update, attention_mask,
    # layer_head_mask and training-mode dropout paths of the HF module are not
    # implemented (encoder self-attention, eval mode only).


# ---------------------------------------------------------------------------
# Pure-JAX reference for the sanity check
# ---------------------------------------------------------------------------
def reference_forward(hidden_states, params, num_heads):
    B, T, E = hidden_states.shape
    H = num_heads
    Dh = E // H
    scale = Dh ** (-0.5)
    q = hidden_states @ params["wq"].T + params["bq"]
    k = hidden_states @ params["wk"].T
    v = hidden_states @ params["wv"].T + params["bv"]
    q = q.reshape(B, T, H, Dh).transpose(0, 2, 1, 3)
    k = k.reshape(B, T, H, Dh).transpose(0, 2, 1, 3)
    v = v.reshape(B, T, H, Dh).transpose(0, 2, 1, 3)
    s = jnp.einsum("bhtd,bhsd->bhts", q, k) * scale
    p = jax.nn.softmax(s, axis=-1)
    o = jnp.einsum("bhts,bhsd->bhtd", p, v)
    o = o.transpose(0, 2, 1, 3).reshape(B, T, E)
    return o @ params["wo"].T + params["bo"]


# ---------------------------------------------------------------------------
if __name__ == "__main__":
    # Small shapes: batch=2, seq=8, embed_dim=32, num_heads=4 -> head_dim=8.
    B, T, E, H = 2, 8, 32, 4

    key = jax.random.PRNGKey(0)
    ks = jax.random.split(key, 8)
    init = lambda k, shape: jax.random.normal(k, shape, jnp.float32) * 0.05
    params = {
        "wq": init(ks[0], (E, E)),
        "bq": init(ks[1], (E,)),
        "wk": init(ks[2], (E, E)),          # k_proj: bias=False
        "wv": init(ks[3], (E, E)),
        "bv": init(ks[4], (E,)),
        "wo": init(ks[5], (E, E)),
        "bo": init(ks[6], (E,)),
    }
    hidden_states = jax.random.normal(ks[7], (B, T, E), jnp.float32)

    ref = reference_forward(hidden_states, params, H)

    # float32 compute path (tight-ish check; approx reciprocal in softmax normalize).
    packed_f32 = pack_whisper_attention_params(params, H, compute_dtype=jnp.float32)
    out_f32 = jax.block_until_ready(
        whisper_flash_attention2_forward(hidden_states, packed_f32, H,
                                         compute_dtype=jnp.float32))
    assert out_f32.shape == (B, T, E)
    assert jnp.allclose(out_f32, ref, atol=2e-3, rtol=2e-3)

    # bfloat16 MXU-operand path (recommended default on v5e/v6e/v7x): looser check.
    packed_bf16 = pack_whisper_attention_params(params, H, compute_dtype=jnp.bfloat16)
    out_bf16 = jax.block_until_ready(
        whisper_flash_attention2_forward(hidden_states, packed_bf16, H,
                                         compute_dtype=jnp.bfloat16))
    assert out_bf16.shape == (B, T, E)
    assert jnp.allclose(out_bf16, ref, atol=3e-2, rtol=3e-2)

    print("KERNEL_OK")
</pallas_src>

<mosaic_0001>
module attributes {stable_mosaic.version = 11 : i64} {
  func.func @_matmul_bias_kernel(%arg0: i32, %arg1: i32, %arg2: i32, %arg3: memref<16x32xf32, #tpu.memory_space<vmem>>, %arg4: memref<32x96xf32, #tpu.memory_space<vmem>>, %arg5: memref<1x96xf32, #tpu.memory_space<vmem>>, %arg6: memref<16x96xf32, #tpu.memory_space<vmem>>, %arg7: memref<16x96xf32, #tpu.memory_space<vmem>>) attributes {dimension_semantics = [#tpu.dimension_semantics<parallel>, #tpu.dimension_semantics<parallel>, #tpu.dimension_semantics<arbitrary>], iteration_bounds = array<i64: 1, 1, 1>, scalar_prefetch = 0 : i64, scratch_operands = 1 : i64, tpu.core_type = #tpu.core_type<tc>, window_params = [{transform_indices = @transform_0, window_bounds = array<i64: 16, 32>}, {transform_indices = @transform_1, window_bounds = array<i64: 32, 96>}, {transform_indices = @transform_2, window_bounds = array<i64: 1, 96>}, {transform_indices = @transform_3, window_bounds = array<i64: 16, 96>}]} {
    %c0_i32 = arith.constant 0 : i32
    %0 = arith.cmpi eq, %arg2, %c0_i32 : i32
    %1 = arith.extui %0 : i1 to i32
    %c0_i32_0 = arith.constant 0 : i32
    %2 = arith.cmpi ne, %1, %c0_i32_0 : i32
    scf.if %2 {
      %cst_10 = arith.constant 0.000000e+00 : f32
      %12 = vector.broadcast %cst_10 : f32 to vector<16x96xf32>
      %c0_11 = arith.constant 0 : index
      %c0_12 = arith.constant 0 : index
      %13 = vector.load %arg7[%c0_11, %c0_12] : memref<16x96xf32, #tpu.memory_space<vmem>>, vector<16x96xf32>
      tpu.vector_store %arg7[%c0_11, %c0_12], %12 {strides = array<i32>} : memref<16x96xf32, #tpu.memory_space<vmem>>, vector<16x96xf32>,
    } else {
    }
    %c0 = arith.constant 0 : index
    %c0_1 = arith.constant 0 : index
    %3 = vector.load %arg7[%c0, %c0_1] : memref<16x96xf32, #tpu.memory_space<vmem>>, vector<16x96xf32>
    %c0_2 = arith.constant 0 : index
    %c0_3 = arith.constant 0 : index
    %4 = vector.load %arg3[%c0_2, %c0_3] : memref<16x32xf32, #tpu.memory_space<vmem>>, vector<16x32xf32>
    %c0_4 = arith.constant 0 : index
    %c0_5 = arith.constant 0 : index
    %5 = vector.load %arg4[%c0_4, %c0_5] : memref<32x96xf32, #tpu.memory_space<vmem>>, vector<32x96xf32>
    %cst = arith.constant dense<0.000000e+00> : vector<16x96xf32>
    %6 = tpu.matmul %4, %5, %cst {dimension_numbers = #tpu.dot_dimension_numbers<[1], [0], [0], [1], [0, 0, 1, 1], [], []>} : vector<16x32xf32>, vector<32x96xf32>, vector<16x96xf32> -> vector<16x96xf32>
    %7 = arith.addf %3, %6 : vector<16x96xf32>
    %c0_6 = arith.constant 0 : index
    %c0_7 = arith.constant 0 : index
    %8 = vector.load %arg7[%c0_6, %c0_7] : memref<16x96xf32, #tpu.memory_space<vmem>>, vector<16x96xf32>
    tpu.vector_store %arg7[%c0_6, %c0_7], %7 {strides = array<i32>} : memref<16x96xf32, #tpu.memory_space<vmem>>, vector<16x96xf32>,
    %c0_i32_8 = arith.constant 0 : i32
    %9 = arith.cmpi eq, %arg2, %c0_i32_8 : i32
    %10 = arith.extui %9 : i1 to i32
    %c0_i32_9 = arith.constant 0 : i32
    %11 = arith.cmpi ne, %10, %c0_i32_9 : i32
    scf.if %11 {
      %c0_10 = arith.constant 0 : index
      %c0_11 = arith.constant 0 : index
      %12 = vector.load %arg7[%c0_10, %c0_11] : memref<16x96xf32, #tpu.memory_space<vmem>>, vector<16x96xf32>
      %c0_12 = arith.constant 0 : index
      %c0_13 = arith.constant 0 : index
      %13 = vector.load %arg5[%c0_12, %c0_13] : memref<1x96xf32, #tpu.memory_space<vmem>>, vector<1x96xf32>
      %14 = vector.broadcast %13 : vector<1x96xf32> to vector<16x96xf32>
      %15 = arith.addf %12, %14 : vector<16x96xf32>
      %c0_14 = arith.constant 0 : index
      %c0_15 = arith.constant 0 : index
      %16 = vector.load %arg6[%c0_14, %c0_15] : memref<16x96xf32, #tpu.memory_space<vmem>>, vector<16x96xf32>
      tpu.vector_store %arg6[%c0_14, %c0_15], %15 {strides = array<i32>} : memref<16x96xf32, #tpu.memory_space<vmem>>, vector<16x96xf32>,
    } else {
    }
    return
  }
  func.func @transform_0(%arg0: i32, %arg1: i32, %arg2: i32) -> (i32, i32) {
    %c0_i32 = arith.constant 0 : i32
    return %arg0, %arg2 : i32, i32
  }
  func.func @transform_1(%arg0: i32, %arg1: i32, %arg2: i32) -> (i32, i32) {
    %c0_i32 = arith.constant 0 : i32
    return %arg2, %arg1 : i32, i32
  }
  func.func @transform_2(%arg0: i32, %arg1: i32, %arg2: i32) -> (i32, i32) {
    %c0_i32 = arith.constant 0 : i32
    %c0_i32_0 = arith.constant 0 : i32
    return %c0_i32, %arg1 : i32, i32
  }
  func.func @transform_3(%arg0: i32, %arg1: i32, %arg2: i32) -> (i32, i32) {
    %c0_i32 = arith.constant 0 : i32
    return %arg0, %arg1 : i32, i32
  }
}

</mosaic_0001>

<llo_original>
// kernel: tpu_custom_call.1
$region0: #{tpu_custom_call.1}
  #allocation0 [shape = 'u32[]', space=smem, size = 0x4, offset = 0x4, fixed_abs, tag = 'smem constant byte address 0x4 - core index']
  #allocation1 [shape = 'u32[144,128]{1,0:T(1,128)}', space=vmem, size = 0x12000, scoped, tag = 'internal scratch']
  #allocation2 [shape = 'f32[16,96]{1,0:T(8,128)}', space=vmem, size = 0x2000, scoped, tag = 'scratch operand']
  %s0 = inlined_call_operand.hbm [shape: f32[16,32], index: 0, kind: input, shape index: {}]
  %s1 = inlined_call_operand.hbm [shape: f32[32,96], index: 1, kind: input, shape index: {}]
  %s2 = inlined_call_operand.vmem [shape: f32[1,96], index: 2, kind: input, shape index: {}]
  %s3 = inlined_call_operand.hbm [shape: f32[16,96], index: 3, kind: output, shape index: {}]
  %s4 = sld [smem:[#allocation0]]
  $region38: #{tpu_custom_call.1} parent=0
    _
  %s6 = ssub.s32 1, %s4
  %s7 = scalar_select 0, %s6, %s4
  $region1: #{tpu_custom_call.1} parent=0
    #allocation3 [shape = 'u8[8192]{0}', space=vmem, size = 0x2000, scoped, tag = 'input window, operand 0, single buffered']
    #allocation4 [shape = 's32[1]{0}', space=sflag, size = 0x4, scoped, tag = 'scoped memory for tpu_custom_call.1']
    #allocation5 [shape = 's32[1]{0}', space=sflag, size = 0x4, scoped, tag = 'scoped memory for tpu_custom_call.1']
    #allocation6 [shape = 'u8[16384]{0}', space=vmem, size = 0x4000, scoped, tag = 'input window, operand 1, single buffered']
    #allocation7 [shape = 's32[1]{0}', space=sflag, size = 0x4, scoped, tag = 'scoped memory for tpu_custom_call.1']
    #allocation8 [shape = 'u8[8192]{0}', space=vmem, size = 0x2000, scoped, tag = 'output window, operand 0, single buffered']
    %8 = vsyncpa [#allocation4], 0
    %9 = vsyncpa [#allocation7], 0
    %10 = vsyncpa [#allocation5], 0
    // Predicated region
    $region2: #{tpu_custom_call.1} parent=1 // pred_check
      _
    $region3: #{tpu_custom_call.1} parent=1 // pred_check_branch
      %12 = sbr.rel (0) target = $region5
    $region4: #{tpu_custom_call.1} parent=1 // pred_region
      %s14 = ssub.s32 256, 256
      %15 = vsyncadd [#allocation4], %s14
      %s16 = sshll.u32 [#allocation3], 4
      %s17 = int_to_ptr.vmem [resolvable:$true] %s16
      %22 = dma.hbm_to_vmem [thread:$0]  %s0, 256, %s17, [#allocation4], 128, 128, 8
    $region5: #{tpu_custom_call.1} parent=1 // pred_fallthru
      _
    // Predicated region
    $region6: #{tpu_custom_call.1} parent=1 // pred_check
      _
    $region7: #{tpu_custom_call.1} parent=1 // pred_check_branch
      %24 = sbr.rel (0) target = $region9
    $region8: #{tpu_custom_call.1} parent=1 // pred_region
      %s26 = ssub.s32 512, 512
      %27 = vsyncadd [#allocation7], %s26
      %s28 = sshll.u32 [#allocation6], 4
      %s29 = int_to_ptr.vmem [resolvable:$true] %s28
      %34 = dma.hbm_to_vmem [thread:$0]  %s1, 512, %s29, [#allocation7], 128, 128, 8
    $region9: #{tpu_custom_call.1} parent=1 // pred_fallthru
      _
    // Predicated region
    $region10: #{tpu_custom_call.1} parent=1 // pred_check
      _
    $region11: #{tpu_custom_call.1} parent=1 // pred_check_branch
      %36 = sbr.rel (0) target = $region13
    $region12: #{tpu_custom_call.1} parent=1 // pred_region
      _
    $region13: #{tpu_custom_call.1} parent=1 // pred_fallthru
      _
    // Predicated region
    $region14: #{tpu_custom_call.1} parent=1 // pred_check
      _
    $region15: #{tpu_custom_call.1} parent=1 // pred_check_branch
      %38 = sbr.rel (0) target = $region17
    $region16: #{tpu_custom_call.1} parent=1 // pred_region
      %39 = dma.done [#allocation4], 256
    $region17: #{tpu_custom_call.1} parent=1 // pred_fallthru
      _
    // Predicated region
    $region18: #{tpu_custom_call.1} parent=1 // pred_check
      _
    $region19: #{tpu_custom_call.1} parent=1 // pred_check_branch
      %41 = sbr.rel (0) target = $region21
    $region20: #{tpu_custom_call.1} parent=1 // pred_region
      %42 = dma.done [#allocation7], 512
    $region21: #{tpu_custom_call.1} parent=1 // pred_fallthru
      _
    %p43 = scmp.eq.s32.totalorder 0, 0
    // Predicated region
    $region22: #{tpu_custom_call.1} parent=1 // pred_check
      %p44 = pneg %p43
    $region23: #{tpu_custom_call.1} parent=1 // pred_check_branch
      %46 = sbr.rel (%p44) target = $region25
    $region24: #{tpu_custom_call.1} parent=1 // pred_region
      %vm47 = vcmask 785408
      %48 = vst.msk [vmem:[#allocation2] sm:$0xff] %vm47, 0.0
      %49 = vst.msk [vmem:[#allocation2 + $0x8] sm:$0xff] %vm47, 0.0
    $region25: #{tpu_custom_call.1} parent=1 // pred_fallthru
      _
    %v50 = vld [vmem:[#allocation2] sm:$0xff]
    %v51 = vld [vmem:[#allocation2 + $0x8] sm:$0xff]
    %v52 = vld [vmem:[#allocation3] sm:$0xff]
    %v53 = vld [vmem:[#allocation3 + $0x8] sm:$0xff]
    %v54 = vld [vmem:[#allocation6] sm:$0xff]
    %v55 = vld [vmem:[#allocation6 + $0x8] sm:$0xff]
    %v56 = vld [vmem:[#allocation6 + $0x10] sm:$0xff]
    %v57 = vld [vmem:[#allocation6 + $0x18] sm:$0xff]
    %vm58 = vcmask 261120
    %v60 = vsel %vm58, %v52, 0
    %v63 = vsel %vm58, %v53, 0
    %65 = vmatprep.subr.mxu0 0.0
    %66 = vmatpush1.msra.mxu0 %v54
    %67 = vmatprep.subr.mxu0 0.0
    %68 = vmatpush1.msra.mxu0 %v55
    %69 = vmatprep.subr.mxu0 0.0
    %70 = vmatpush1.msra.mxu0 %v56
    %71 = vmatprep.subr.mxu0 0.0
    %72 = vmatpush1.msra.mxu0 %v57
    %73 = vmatprep.subr.mxu0 0.0
    %74 = vmatpush1.msra.mxu0 0.0
    %75 = vmatprep.subr.mxu0 0.0
    %76 = vmatpush1.msra.mxu0 0.0
    %77 = vmatprep.subr.mxu0 0.0
    %78 = vmatpush1.msra.mxu0 0.0
    %79 = vmatprep.subr.mxu0 0.0
    %80 = vmatpush1.msra.mxu0 0.0
    %81 = vmatprep.subr.mxu0 0.0
    %82 = vmatpush1.msra.mxu0 0.0
    %83 = vmatprep.subr.mxu0 0.0
    %84 = vmatpush1.msra.mxu0 0.0
    %85 = vmatprep.subr.mxu0 0.0
    %86 = vmatpush1.msra.mxu0 0.0
    %87 = vmatprep.subr.mxu0 0.0
    %88 = vmatpush1.msra.mxu0 0.0
    %89 = vmatprep.subr.mxu0 0.0
    %90 = vmatpush1.msra.mxu0 0.0
    %91 = vmatprep.subr.mxu0 0.0
    %92 = vmatpush1.msra.mxu0 0.0
    %93 = vmatprep.subr.mxu0 0.0
    %94 = vmatpush1.msra.mxu0 0.0
    %95 = vmatprep.subr.mxu0 0.0
    %96 = vmatpush1.msra.mxu0 0.0
    %97 = vmatprep.subr.mxu0 0.0
    %98 = vmatpush1.msra.mxu0 0.0
    %99 = vmatprep.subr.mxu0 0.0
    %100 = vmatpush1.msra.mxu0 0.0
    %101 = vmatprep.subr.mxu0 0.0
    %102 = vmatpush1.msra.mxu0 0.0
    %103 = vmatprep.subr.mxu0 0.0
    %104 = vmatpush1.msra.mxu0 0.0
    %105 = vmatprep.subr.mxu0 0.0
    %106 = vmatpush1.msra.mxu0 0.0
    %107 = vmatprep.subr.mxu0 0.0
    %108 = vmatpush1.msra.mxu0 0.0
    %109 = vmatprep.subr.mxu0 0.0
    %110 = vmatpush1.msra.mxu0 0.0
    %111 = vmatprep.subr.mxu0 0.0
    %112 = vmatpush1.msra.mxu0 0.0
    %113 = vmatprep.subr.mxu0 0.0
    %114 = vmatpush1.msra.mxu0 0.0
    %115 = vmatprep.subr.mxu0 0.0
    %116 = vmatpush1.msra.mxu0 0.0
    %117 = vmatprep.subr.mxu0 0.0
    %118 = vmatpush1.msra.mxu0 0.0
    %119 = vmatprep.subr.mxu0 0.0
    %120 = vmatpush1.msra.mxu0 0.0
    %121 = vmatprep.subr.mxu0 0.0
    %122 = vmatpush1.msra.mxu0 0.0
    %123 = vmatprep.subr.mxu0 0.0
    %124 = vmatpush1.msra.mxu0 0.0
    %125 = vmatprep.subr.mxu0 0.0
    %126 = vmatpush1.msra.mxu0 0.0
    %127 = vmatprep.subr.mxu0 0.0
    %128 = vmatpush1.msra.mxu0 0.0
    %129 = vmatprep.mubr.f32.mxu0 0.0
    %130 = vmatmul.mubr.f32.gmra.mrb[0].mxu0 %v60
    %v131 = vpop.f32.mrb[0].mxu0
    %v132 = vadd.f32 0.0, %v131
    %v133 = vpop.f32.mrb[0].mxu0
    %134 = vmatprep.mubr.f32.mxu0 0.0
    %135 = vmatmul.mubr.f32.gmra.mrb[0].mxu0 %v63
    %v136 = vpop.f32.mrb[0].mxu0
    %v137 = vadd.f32 0.0, %v136
    %v138 = vpop.f32.mrb[0].mxu0
    %139 = vdwg.mxu0
    %v140 = vadd.f32 %v50, %v132
    %v141 = vadd.f32 %v51, %v137
    %vm142 = vcmask 785408
    %143 = vst.msk [vmem:[#allocation2] sm:$0xff] %vm142, %v140
    %144 = vst.msk [vmem:[#allocation2 + $0x8] sm:$0xff] %vm142, %v141
    // Predicated region
    $region26: #{tpu_custom_call.1} parent=1 // pred_check
      %p145 = pneg %p43
    $region27: #{tpu_custom_call.1} parent=1 // pred_check_branch
      %147 = sbr.rel (%p145) target = $region29
    $region28: #{tpu_custom_call.1} parent=1 // pred_region
      %v148 = vld [vmem:[#allocation2] sm:$0xff]
      %v149 = vld [vmem:[#allocation2 + $0x8] sm:$0xff]
      %v150 = vld [vmem:[%s2] sm:$0x1]
      %v152 = vlaneseq
      %v153 = vshrl.u32 %v152, 7
      %v154 = vsub.s32 0, %v153
      %v155 = vrot.slane %v150, %v154
      %v157 = vadd.f32 %v148, %v155
      %v158 = vadd.f32 %v149, %v155
      %159 = vst.msk [vmem:[#allocation8] sm:$0xff] %vm142, %v157
      %160 = vst.msk [vmem:[#allocation8 + $0x8] sm:$0xff] %vm142, %v158
    $region29: #{tpu_custom_call.1} parent=1 // pred_fallthru
      _
    // Predicated region
    $region30: #{tpu_custom_call.1} parent=1 // pred_check
      _
    $region31: #{tpu_custom_call.1} parent=1 // pred_check_branch
      %162 = sbr.rel (0) target = $region33
    $region32: #{tpu_custom_call.1} parent=1 // pred_region
      %s164 = ssub.s32 256, 256
      %165 = vsyncadd [#allocation5], %s164
      %s166 = sshll.u32 [#allocation8], 4
      %s167 = int_to_ptr.vmem [resolvable:$true] %s166
      %172 = dma.vmem_to_hbm [thread:$0]  %s167, 256, %s3, [#allocation5], 128, 128, 8
    $region33: #{tpu_custom_call.1} parent=1 // pred_fallthru
      _
    // Predicated region
    $region34: #{tpu_custom_call.1} parent=1 // pred_check
      _
    $region35: #{tpu_custom_call.1} parent=1 // pred_check_branch
      %174 = sbr.rel (0) target = $region37
    $region36: #{tpu_custom_call.1} parent=1 // pred_region
      %175 = dma.done [#allocation5], 256
    $region37: #{tpu_custom_call.1} parent=1 // pred_fallthru
      _
    %176 = vsyncpa [#allocation4], 1
    %177 = vsyncpa [#allocation7], 1
    %178 = vsyncpa [#allocation5], 1

</llo_original>
